<compile_context>
chip_gen: v7x
topology: tpu7x:2x2x1
jax: 0.10.0
libtpu: 0.0.40
codegen_flags: <defaults>
</compile_context>

<pallas_src>
import functools

import jax
import jax.numpy as jnp
from jax.experimental import pallas as pl
from jax.experimental.pallas import tpu as pltpu


def _round_up(x, m):
    return ((x + m - 1) // m) * m


def _policy_kernel(out_dim,
                   obs_ref,
                   w1, b1, w2, b2, w3, b3, w4, b4, w5, b5,
                   pred_ref):
    """One batch tile of the 5-layer MLP.

    Weights are bf16 (MXU-native); activations are carried in f32 so tanh/exp
    run on the f32 VPU/EUP path (required on v5e) and every dot accumulates in
    f32 via preferred_element_type. The output layer is a single dot of width
    2*out_dim; exp is applied only to the std lanes via a lane mask, giving one
    MXU pass and one output store stream for the last layer.
    """
    wdt = w1.dtype
    h = obs_ref[...]
    h = jnp.tanh(jnp.dot(h.astype(wdt), w1[...],
                         preferred_element_type=jnp.float32) + b1[...])
    h = jnp.tanh(jnp.dot(h.astype(wdt), w2[...],
                         preferred_element_type=jnp.float32) + b2[...])
    h = jnp.tanh(jnp.dot(h.astype(wdt), w3[...],
                         preferred_element_type=jnp.float32) + b3[...])
    h = jnp.tanh(jnp.dot(h.astype(wdt), w4[...],
                         preferred_element_type=jnp.float32) + b4[...])
    pred = jnp.dot(h.astype(wdt), w5[...],
                   preferred_element_type=jnp.float32) + b5[...]
    lane = jax.lax.broadcasted_iota(jnp.int32, pred.shape, 1)
    pred_ref[...] = jnp.where(lane >= out_dim, jnp.exp(pred), pred)


def policy_forward(obs, params, out_dim, *, tb_max=1024, use_bf16=True):
    """Returns (mean, scale) of the Normal distribution produced by Policy.forward.

    params = [w1, b1, w2, b2, w3, b3, w4, b4, w5, b5] with w5: (64, 2*out_dim),
    b5: (1, 2*out_dim). Weights are cast to bf16 once here (host/XLA side);
    biases stay f32 and are added to the f32 accumulators in-kernel.
    """
    B, in_dim = obs.shape
    w1, b1, w2, b2, w3, b3, w4, b4, w5, b5 = params
    hid = w1.shape[1]

    wdt = jnp.bfloat16 if use_bf16 else jnp.float32
    kernel_params = (
        w1.astype(wdt), b1, w2.astype(wdt), b2, w3.astype(wdt), b3,
        w4.astype(wdt), b4, w5.astype(wdt), b5,
    )

    # Batch tile: the only real throughput lever here (K=N=64). Big tiles
    # amortize the ~0.35us/step overhead; VMEM footprint stays tiny.
    TB = min(_round_up(max(B, 8), 8), tb_max)
    # v7x: force >=2 grid steps for large batches so the "parallel" axis shards
    # across both TensorCores (no-op cost on 1-TC v5e/v6e).
    if B > 512 and pl.cdiv(B, TB) < 2:
        TB = _round_up(pl.cdiv(B, 2), 8)
    grid = (pl.cdiv(B, TB),)

    obs_spec = pl.BlockSpec((TB, in_dim), lambda i: (i, 0))
    pred_spec = pl.BlockSpec((TB, 2 * out_dim), lambda i: (i, 0))
    # Weights/biases: full-array blocks with constant index_map -> VMEM-resident,
    # no re-DMA across grid steps.
    param_specs = [pl.BlockSpec(p.shape, lambda i: (0, 0)) for p in kernel_params]

    flops = 2 * B * (in_dim * hid + 3 * hid * hid + hid * 2 * out_dim)
    transcendentals = 4 * B * hid + B * 2 * out_dim
    bytes_accessed = int(
        obs.size * obs.dtype.itemsize
        + sum(int(p.size) * p.dtype.itemsize for p in kernel_params)
        + 4 * B * 2 * out_dim)

    pred = pl.pallas_call(
        functools.partial(_policy_kernel, out_dim),
        out_shape=jax.ShapeDtypeStruct((B, 2 * out_dim), jnp.float32),
        grid=grid,
        in_specs=[obs_spec] + param_specs,
        out_specs=pred_spec,
        compiler_params=pltpu.CompilerParams(
            dimension_semantics=("parallel",),   # v7x: shard batch tiles over 2 TCs
            vmem_limit_bytes=32 << 20,           # explicit budget, portable to v7x
        ),
        cost_estimate=pl.CostEstimate(
            flops=flops,
            transcendentals=transcendentals,
            bytes_accessed=bytes_accessed,
        ),
    )(obs, *kernel_params)

    # Mean / scale split in the wrapper: plain XLA slice on the HBM result.
    mean = pred[:, :out_dim]
    scale = pred[:, out_dim:]   # exp already applied in-kernel to these lanes
    return mean, scale


def init_params(key, in_dim, out_dim, n_layers=4, size=64):
    """Deterministic init mimicking nn.Linear default (U(-1/sqrt(fan_in), 1/sqrt(fan_in)))."""
    dims = [in_dim] + [size] * n_layers + [2 * out_dim]
    params = []
    for i in range(len(dims) - 1):
        fan_in, fan_out = dims[i], dims[i + 1]
        key, kw, kb = jax.random.split(key, 3)
        bound = 1.0 / jnp.sqrt(fan_in)
        w = jax.random.uniform(kw, (fan_in, fan_out), jnp.float32, -bound, bound)
        b = jax.random.uniform(kb, (1, fan_out), jnp.float32, -bound, bound)
        params.append(w)
        params.append(b)
    return params


def policy_forward_ref(obs, params, out_dim):
    """Pure-JAX f32 reference (matches the PyTorch module) for correctness checking."""
    h = obs
    ws = params[0::2]
    bs = params[1::2]
    for w, b in zip(ws[:-1], bs[:-1]):
        h = jnp.tanh(h @ w + b)
    pred = h @ ws[-1] + bs[-1]
    return pred[:, :out_dim], jnp.exp(pred[:, out_dim:])


if __name__ == "__main__":
    key = jax.random.PRNGKey(0)
    in_dim, out_dim = 16, 4

    key, k_obs, k_params = jax.random.split(key, 3)
    params = init_params(k_params, in_dim, out_dim)

    # Small-shape check (single grid step).
    obs = jax.random.normal(k_obs, (8, in_dim), jnp.float32)
    mean, scale = policy_forward(obs, params, out_dim)
    jax.block_until_ready((mean, scale))
    mean_ref, scale_ref = policy_forward_ref(obs, params, out_dim)
    # bf16 MXU operands vs f32 reference: relaxed tolerance.
    assert jnp.allclose(mean, mean_ref, atol=2e-2, rtol=2e-2)
    assert jnp.allclose(scale, scale_ref, atol=2e-2, rtol=2e-2)

    # Multi-step grid path: B=640 -> 2 tiles of 320 rows (weights stay VMEM
    # resident across steps; on v7x the two tiles land on the two TensorCores).
    key, k_obs2 = jax.random.split(key)
    obs2 = jax.random.normal(k_obs2, (640, in_dim), jnp.float32)
    mean2, scale2 = policy_forward(obs2, params, out_dim)
    jax.block_until_ready((mean2, scale2))
    mean2_ref, scale2_ref = policy_forward_ref(obs2, params, out_dim)
    assert jnp.allclose(mean2, mean2_ref, atol=2e-2, rtol=2e-2)
    assert jnp.allclose(scale2, scale2_ref, atol=2e-2, rtol=2e-2)

    print("KERNEL_OK")
</pallas_src>

<mosaic_0001>
module attributes {stable_mosaic.version = 11 : i64} {
  func.func @_policy_kernel(%arg0: i32, %arg1: memref<8x16xf32, #tpu.memory_space<vmem>>, %arg2: memref<16x64xbf16, #tpu.memory_space<vmem>>, %arg3: memref<1x64xf32, #tpu.memory_space<vmem>>, %arg4: memref<64x64xbf16, #tpu.memory_space<vmem>>, %arg5: memref<1x64xf32, #tpu.memory_space<vmem>>, %arg6: memref<64x64xbf16, #tpu.memory_space<vmem>>, %arg7: memref<1x64xf32, #tpu.memory_space<vmem>>, %arg8: memref<64x64xbf16, #tpu.memory_space<vmem>>, %arg9: memref<1x64xf32, #tpu.memory_space<vmem>>, %arg10: memref<64x8xbf16, #tpu.memory_space<vmem>>, %arg11: memref<1x8xf32, #tpu.memory_space<vmem>>, %arg12: memref<8x8xf32, #tpu.memory_space<vmem>>) attributes {dimension_semantics = [#tpu.dimension_semantics<parallel>], iteration_bounds = array<i64: 1>, scalar_prefetch = 0 : i64, scratch_operands = 0 : i64, tpu.core_type = #tpu.core_type<tc>, window_params = [{transform_indices = @transform_0, window_bounds = array<i64: 8, 16>}, {pipeline_mode = #tpu.pipeline_mode<synchronous>, transform_indices = @transform_1, window_bounds = array<i64: 16, 64>}, {pipeline_mode = #tpu.pipeline_mode<synchronous>, transform_indices = @transform_2, window_bounds = array<i64: 1, 64>}, {pipeline_mode = #tpu.pipeline_mode<synchronous>, transform_indices = @transform_3, window_bounds = array<i64: 64, 64>}, {pipeline_mode = #tpu.pipeline_mode<synchronous>, transform_indices = @transform_4, window_bounds = array<i64: 1, 64>}, {pipeline_mode = #tpu.pipeline_mode<synchronous>, transform_indices = @transform_5, window_bounds = array<i64: 64, 64>}, {pipeline_mode = #tpu.pipeline_mode<synchronous>, transform_indices = @transform_6, window_bounds = array<i64: 1, 64>}, {pipeline_mode = #tpu.pipeline_mode<synchronous>, transform_indices = @transform_7, window_bounds = array<i64: 64, 64>}, {pipeline_mode = #tpu.pipeline_mode<synchronous>, transform_indices = @transform_8, window_bounds = array<i64: 1, 64>}, {pipeline_mode = #tpu.pipeline_mode<synchronous>, transform_indices = @transform_9, window_bounds = array<i64: 64, 8>}, {pipeline_mode = #tpu.pipeline_mode<synchronous>, transform_indices = @transform_10, window_bounds = array<i64: 1, 8>}, {transform_indices = @transform_11, window_bounds = array<i64: 8, 8>}]} {
    %c0 = arith.constant 0 : index
    %c0_0 = arith.constant 0 : index
    %0 = vector.load %arg1[%c0, %c0_0] : memref<8x16xf32, #tpu.memory_space<vmem>>, vector<8x16xf32>
    %1 = arith.truncf %0 : vector<8x16xf32> to vector<8x16xbf16>
    %c0_1 = arith.constant 0 : index
    %c0_2 = arith.constant 0 : index
    %2 = vector.load %arg2[%c0_1, %c0_2] : memref<16x64xbf16, #tpu.memory_space<vmem>>, vector<16x64xbf16>
    %cst = arith.constant dense<0.000000e+00> : vector<8x64xf32>
    %3 = tpu.matmul %1, %2, %cst {dimension_numbers = #tpu.dot_dimension_numbers<[1], [0], [0], [1], [0, 0, 1, 1], [], []>} : vector<8x16xbf16>, vector<16x64xbf16>, vector<8x64xf32> -> vector<8x64xf32>
    %c0_3 = arith.constant 0 : index
    %c0_4 = arith.constant 0 : index
    %4 = vector.load %arg3[%c0_3, %c0_4] : memref<1x64xf32, #tpu.memory_space<vmem>>, vector<1x64xf32>
    %5 = vector.broadcast %4 : vector<1x64xf32> to vector<8x64xf32>
    %6 = arith.addf %3, %5 : vector<8x64xf32>
    %7 = math.tanh %6 : vector<8x64xf32>
    %8 = arith.truncf %7 : vector<8x64xf32> to vector<8x64xbf16>
    %c0_5 = arith.constant 0 : index
    %c0_6 = arith.constant 0 : index
    %9 = vector.load %arg4[%c0_5, %c0_6] : memref<64x64xbf16, #tpu.memory_space<vmem>>, vector<64x64xbf16>
    %cst_7 = arith.constant dense<0.000000e+00> : vector<8x64xf32>
    %10 = tpu.matmul %8, %9, %cst_7 {dimension_numbers = #tpu.dot_dimension_numbers<[1], [0], [0], [1], [0, 0, 1, 1], [], []>} : vector<8x64xbf16>, vector<64x64xbf16>, vector<8x64xf32> -> vector<8x64xf32>
    %c0_8 = arith.constant 0 : index
    %c0_9 = arith.constant 0 : index
    %11 = vector.load %arg5[%c0_8, %c0_9] : memref<1x64xf32, #tpu.memory_space<vmem>>, vector<1x64xf32>
    %12 = vector.broadcast %11 : vector<1x64xf32> to vector<8x64xf32>
    %13 = arith.addf %10, %12 : vector<8x64xf32>
    %14 = math.tanh %13 : vector<8x64xf32>
    %15 = arith.truncf %14 : vector<8x64xf32> to vector<8x64xbf16>
    %c0_10 = arith.constant 0 : index
    %c0_11 = arith.constant 0 : index
    %16 = vector.load %arg6[%c0_10, %c0_11] : memref<64x64xbf16, #tpu.memory_space<vmem>>, vector<64x64xbf16>
    %cst_12 = arith.constant dense<0.000000e+00> : vector<8x64xf32>
    %17 = tpu.matmul %15, %16, %cst_12 {dimension_numbers = #tpu.dot_dimension_numbers<[1], [0], [0], [1], [0, 0, 1, 1], [], []>} : vector<8x64xbf16>, vector<64x64xbf16>, vector<8x64xf32> -> vector<8x64xf32>
    %c0_13 = arith.constant 0 : index
    %c0_14 = arith.constant 0 : index
    %18 = vector.load %arg7[%c0_13, %c0_14] : memref<1x64xf32, #tpu.memory_space<vmem>>, vector<1x64xf32>
    %19 = vector.broadcast %18 : vector<1x64xf32> to vector<8x64xf32>
    %20 = arith.addf %17, %19 : vector<8x64xf32>
    %21 = math.tanh %20 : vector<8x64xf32>
    %22 = arith.truncf %21 : vector<8x64xf32> to vector<8x64xbf16>
    %c0_15 = arith.constant 0 : index
    %c0_16 = arith.constant 0 : index
    %23 = vector.load %arg8[%c0_15, %c0_16] : memref<64x64xbf16, #tpu.memory_space<vmem>>, vector<64x64xbf16>
    %cst_17 = arith.constant dense<0.000000e+00> : vector<8x64xf32>
    %24 = tpu.matmul %22, %23, %cst_17 {dimension_numbers = #tpu.dot_dimension_numbers<[1], [0], [0], [1], [0, 0, 1, 1], [], []>} : vector<8x64xbf16>, vector<64x64xbf16>, vector<8x64xf32> -> vector<8x64xf32>
    %c0_18 = arith.constant 0 : index
    %c0_19 = arith.constant 0 : index
    %25 = vector.load %arg9[%c0_18, %c0_19] : memref<1x64xf32, #tpu.memory_space<vmem>>, vector<1x64xf32>
    %26 = vector.broadcast %25 : vector<1x64xf32> to vector<8x64xf32>
    %27 = arith.addf %24, %26 : vector<8x64xf32>
    %28 = math.tanh %27 : vector<8x64xf32>
    %29 = arith.truncf %28 : vector<8x64xf32> to vector<8x64xbf16>
    %c0_20 = arith.constant 0 : index
    %c0_21 = arith.constant 0 : index
    %30 = vector.load %arg10[%c0_20, %c0_21] : memref<64x8xbf16, #tpu.memory_space<vmem>>, vector<64x8xbf16>
    %cst_22 = arith.constant dense<0.000000e+00> : vector<8x8xf32>
    %31 = tpu.matmul %29, %30, %cst_22 {dimension_numbers = #tpu.dot_dimension_numbers<[1], [0], [0], [1], [0, 0, 1, 1], [], []>} : vector<8x64xbf16>, vector<64x8xbf16>, vector<8x8xf32> -> vector<8x8xf32>
    %c0_23 = arith.constant 0 : index
    %c0_24 = arith.constant 0 : index
    %32 = vector.load %arg11[%c0_23, %c0_24] : memref<1x8xf32, #tpu.memory_space<vmem>>, vector<1x8xf32>
    %33 = vector.broadcast %32 : vector<1x8xf32> to vector<8x8xf32>
    %34 = arith.addf %31, %33 : vector<8x8xf32>
    %35 = tpu.iota {dimensions = array<i32: 1>} : vector<8x8xi32>
    %c4_i32 = arith.constant 4 : i32
    %36 = vector.broadcast %c4_i32 : i32 to vector<8x8xi32>
    %37 = arith.cmpi sge, %35, %36 : vector<8x8xi32>
    %38 = math.exp %34 : vector<8x8xf32>
    %39 = arith.select %37, %38, %34 : vector<8x8xi1>, vector<8x8xf32>
    %c0_25 = arith.constant 0 : index
    %c0_26 = arith.constant 0 : index
    %40 = vector.load %arg12[%c0_25, %c0_26] : memref<8x8xf32, #tpu.memory_space<vmem>>, vector<8x8xf32>
    tpu.vector_store %arg12[%c0_25, %c0_26], %39 {strides = array<i32>} : memref<8x8xf32, #tpu.memory_space<vmem>>, vector<8x8xf32>,
    return
  }
  func.func @transform_0(%arg0: i32) -> (i32, i32) {
    %c0_i32 = arith.constant 0 : i32
    %c0_i32_0 = arith.constant 0 : i32
    return %arg0, %c0_i32 : i32, i32
  }
  func.func @transform_1(%arg0: i32) -> (i32, i32) {
    %c0_i32 = arith.constant 0 : i32
    %c0_i32_0 = arith.constant 0 : i32
    %c0_i32_1 = arith.constant 0 : i32
    return %c0_i32, %c0_i32_0 : i32, i32
  }
  func.func @transform_2(%arg0: i32) -> (i32, i32) {
    %c0_i32 = arith.constant 0 : i32
    %c0_i32_0 = arith.constant 0 : i32
    %c0_i32_1 = arith.constant 0 : i32
    return %c0_i32, %c0_i32_0 : i32, i32
  }
  func.func @transform_3(%arg0: i32) -> (i32, i32) {
    %c0_i32 = arith.constant 0 : i32
    %c0_i32_0 = arith.constant 0 : i32
    %c0_i32_1 = arith.constant 0 : i32
    return %c0_i32, %c0_i32_0 : i32, i32
  }
  func.func @transform_4(%arg0: i32) -> (i32, i32) {
    %c0_i32 = arith.constant 0 : i32
    %c0_i32_0 = arith.constant 0 : i32
    %c0_i32_1 = arith.constant 0 : i32
    return %c0_i32, %c0_i32_0 : i32, i32
  }
  func.func @transform_5(%arg0: i32) -> (i32, i32) {
    %c0_i32 = arith.constant 0 : i32
    %c0_i32_0 = arith.constant 0 : i32
    %c0_i32_1 = arith.constant 0 : i32
    return %c0_i32, %c0_i32_0 : i32, i32
  }
  func.func @transform_6(%arg0: i32) -> (i32, i32) {
    %c0_i32 = arith.constant 0 : i32
    %c0_i32_0 = arith.constant 0 : i32
    %c0_i32_1 = arith.constant 0 : i32
    return %c0_i32, %c0_i32_0 : i32, i32
  }
  func.func @transform_7(%arg0: i32) -> (i32, i32) {
    %c0_i32 = arith.constant 0 : i32
    %c0_i32_0 = arith.constant 0 : i32
    %c0_i32_1 = arith.constant 0 : i32
    return %c0_i32, %c0_i32_0 : i32, i32
  }
  func.func @transform_8(%arg0: i32) -> (i32, i32) {
    %c0_i32 = arith.constant 0 : i32
    %c0_i32_0 = arith.constant 0 : i32
    %c0_i32_1 = arith.constant 0 : i32
    return %c0_i32, %c0_i32_0 : i32, i32
  }
  func.func @transform_9(%arg0: i32) -> (i32, i32) {
    %c0_i32 = arith.constant 0 : i32
    %c0_i32_0 = arith.constant 0 : i32
    %c0_i32_1 = arith.constant 0 : i32
    return %c0_i32, %c0_i32_0 : i32, i32
  }
  func.func @transform_10(%arg0: i32) -> (i32, i32) {
    %c0_i32 = arith.constant 0 : i32
    %c0_i32_0 = arith.constant 0 : i32
    %c0_i32_1 = arith.constant 0 : i32
    return %c0_i32, %c0_i32_0 : i32, i32
  }
  func.func @transform_11(%arg0: i32) -> (i32, i32) {
    %c0_i32 = arith.constant 0 : i32
    %c0_i32_0 = arith.constant 0 : i32
    return %arg0, %c0_i32 : i32, i32
  }
}

</mosaic_0001>

<llo_original>
// kernel: tpu_custom_call.1
$region0: #{tpu_custom_call.1}
  #allocation0 [shape = 'u32[]', space=smem, size = 0x4, offset = 0x4, fixed_abs, tag = 'smem constant byte address 0x4 - core index']
  #allocation1 [shape = 'u32[144,128]{1,0:T(1,128)}', space=vmem, size = 0x12000, scoped, tag = 'internal scratch']
  %s0 = inlined_call_operand.vmem [shape: f32[8,16], index: 0, kind: input, shape index: {}]
  %s1 = inlined_call_operand.hbm [shape: bf16[16,64], index: 1, kind: input, shape index: {}]
  %s2 = inlined_call_operand.vmem [shape: f32[1,64], index: 2, kind: input, shape index: {}]
  %s3 = inlined_call_operand.vmem [shape: bf16[64,64], index: 3, kind: input, shape index: {}]
  %s4 = inlined_call_operand.vmem [shape: f32[1,64], index: 4, kind: input, shape index: {}]
  %s5 = inlined_call_operand.hbm [shape: bf16[64,64], index: 5, kind: input, shape index: {}]
  %s6 = inlined_call_operand.vmem [shape: f32[1,64], index: 6, kind: input, shape index: {}]
  %s7 = inlined_call_operand.hbm [shape: bf16[64,64], index: 7, kind: input, shape index: {}]
  %s8 = inlined_call_operand.vmem [shape: f32[1,64], index: 8, kind: input, shape index: {}]
  %s9 = inlined_call_operand.vmem [shape: bf16[64,8], index: 9, kind: input, shape index: {}]
  %s10 = inlined_call_operand.vmem [shape: f32[1,8], index: 10, kind: input, shape index: {}]
  %s11 = inlined_call_operand.hbm [shape: f32[8,8], index: 11, kind: output, shape index: {}]
  %s12 = sld [smem:[#allocation0]]
  $region66: #{tpu_custom_call.1} parent=0
    _
  %s14 = ssub.s32 1, %s12
  %s15 = scalar_select 0, %s14, %s12
  $region1: #{tpu_custom_call.1} parent=0
    #allocation2 [shape = 'u8[4096]{0}', space=vmem, size = 0x1000, scoped, tag = 'input window, operand 1, single buffered']
    #allocation3 [shape = 's32[1]{0}', space=sflag, size = 0x4, scoped, tag = 'scoped memory for tpu_custom_call.1']
    #allocation4 [shape = 's32[1]{0}', space=sflag, size = 0x4, scoped, tag = 'scoped memory for tpu_custom_call.1']
    #allocation5 [shape = 'u8[16384]{0}', space=vmem, size = 0x4000, scoped, tag = 'input window, operand 5, single buffered']
    #allocation6 [shape = 's32[1]{0}', space=sflag, size = 0x4, scoped, tag = 'scoped memory for tpu_custom_call.1']
    #allocation7 [shape = 'u8[16384]{0}', space=vmem, size = 0x4000, scoped, tag = 'input window, operand 7, single buffered']
    #allocation8 [shape = 'u8[4096]{0}', space=vmem, size = 0x1000, scoped, tag = 'output window, operand 0, single buffered']
    %16 = vsyncpa [#allocation3], 0
    %17 = vsyncpa [#allocation6], 0
    %18 = vsyncpa [#allocation4], 0
    // Predicated region
    $region2: #{tpu_custom_call.1} parent=1 // pred_check
      _
    $region3: #{tpu_custom_call.1} parent=1 // pred_check_branch
      %20 = sbr.rel (0) target = $region5
    $region4: #{tpu_custom_call.1} parent=1 // pred_region
      _
    $region5: #{tpu_custom_call.1} parent=1 // pred_fallthru
      _
    // Predicated region
    $region6: #{tpu_custom_call.1} parent=1 // pred_check
      _
    $region7: #{tpu_custom_call.1} parent=1 // pred_check_branch
      %22 = sbr.rel (0) target = $region9
    $region8: #{tpu_custom_call.1} parent=1 // pred_region
      %s24 = ssub.s32 128, 128
      %25 = vsyncadd [#allocation3], %s24
      %s26 = sshll.u32 [#allocation2], 4
      %s27 = int_to_ptr.vmem [resolvable:$true] %s26
      %32 = dma.hbm_to_vmem [thread:$0]  %s1, 128, %s27, [#allocation3], 64, 64, 4
    $region9: #{tpu_custom_call.1} parent=1 // pred_fallthru
      _
    // Predicated region
    $region10: #{tpu_custom_call.1} parent=1 // pred_check
      _
    $region11: #{tpu_custom_call.1} parent=1 // pred_check_branch
      %34 = sbr.rel (0) target = $region13
    $region12: #{tpu_custom_call.1} parent=1 // pred_region
      _
    $region13: #{tpu_custom_call.1} parent=1 // pred_fallthru
      _
    // Predicated region
    $region14: #{tpu_custom_call.1} parent=1 // pred_check
      _
    $region15: #{tpu_custom_call.1} parent=1 // pred_check_branch
      %36 = sbr.rel (0) target = $region17
    $region16: #{tpu_custom_call.1} parent=1 // pred_region
      _
    $region17: #{tpu_custom_call.1} parent=1 // pred_fallthru
      _
    // Predicated region
    $region18: #{tpu_custom_call.1} parent=1 // pred_check
      _
    $region19: #{tpu_custom_call.1} parent=1 // pred_check_branch
      %38 = sbr.rel (0) target = $region21
    $region20: #{tpu_custom_call.1} parent=1 // pred_region
      _
    $region21: #{tpu_custom_call.1} parent=1 // pred_fallthru
      _
    // Predicated region
    $region22: #{tpu_custom_call.1} parent=1 // pred_check
      _
    $region23: #{tpu_custom_call.1} parent=1 // pred_check_branch
      %40 = sbr.rel (0) target = $region25
    $region24: #{tpu_custom_call.1} parent=1 // pred_region
      %s42 = ssub.s32 512, 512
      %43 = vsyncadd [#allocation6], %s42
      %s44 = sshll.u32 [#allocation5], 4
      %s45 = int_to_ptr.vmem [resolvable:$true] %s44
      %50 = dma.hbm_to_vmem [thread:$0]  %s5, 512, %s45, [#allocation6], 64, 64, 4
    $region25: #{tpu_custom_call.1} parent=1 // pred_fallthru
      _
    // Predicated region
    $region26: #{tpu_custom_call.1} parent=1 // pred_check
      _
    $region27: #{tpu_custom_call.1} parent=1 // pred_check_branch
      %52 = sbr.rel (0) target = $region29
    $region28: #{tpu_custom_call.1} parent=1 // pred_region
      _
    $region29: #{tpu_custom_call.1} parent=1 // pred_fallthru
      _
    // Predicated region
    $region30: #{tpu_custom_call.1} parent=1 // pred_check
      _
    $region31: #{tpu_custom_call.1} parent=1 // pred_check_branch
      %54 = sbr.rel (0) target = $region33
    $region32: #{tpu_custom_call.1} parent=1 // pred_region
      %s56 = ssub.s32 512, 512
      %57 = vsyncadd [#allocation6], %s56
      %s58 = sshll.u32 [#allocation7], 4
      %s59 = int_to_ptr.vmem [resolvable:$true] %s58
      %64 = dma.hbm_to_vmem [thread:$0]  %s7, 512, %s59, [#allocation6], 64, 64, 4
    $region33: #{tpu_custom_call.1} parent=1 // pred_fallthru
      _
    // Predicated region
    $region34: #{tpu_custom_call.1} parent=1 // pred_check
      _
    $region35: #{tpu_custom_call.1} parent=1 // pred_check_branch
      %66 = sbr.rel (0) target = $region37
    $region36: #{tpu_custom_call.1} parent=1 // pred_region
      _
    $region37: #{tpu_custom_call.1} parent=1 // pred_fallthru
      _
    // Predicated region
    $region38: #{tpu_custom_call.1} parent=1 // pred_check
      _
    $region39: #{tpu_custom_call.1} parent=1 // pred_check_branch
      %68 = sbr.rel (0) target = $region41
    $region40: #{tpu_custom_call.1} parent=1 // pred_region
      _
    $region41: #{tpu_custom_call.1} parent=1 // pred_fallthru
      _
    // Predicated region
    $region42: #{tpu_custom_call.1} parent=1 // pred_check
      _
    $region43: #{tpu_custom_call.1} parent=1 // pred_check_branch
      %70 = sbr.rel (0) target = $region45
    $region44: #{tpu_custom_call.1} parent=1 // pred_region
      _
    $region45: #{tpu_custom_call.1} parent=1 // pred_fallthru
      _
    // Predicated region
    $region46: #{tpu_custom_call.1} parent=1 // pred_check
      _
    $region47: #{tpu_custom_call.1} parent=1 // pred_check_branch
      %72 = sbr.rel (0) target = $region49
    $region48: #{tpu_custom_call.1} parent=1 // pred_region
      %73 = dma.done [#allocation3], 128
    $region49: #{tpu_custom_call.1} parent=1 // pred_fallthru
      _
    // Predicated region
    $region50: #{tpu_custom_call.1} parent=1 // pred_check
      _
    $region51: #{tpu_custom_call.1} parent=1 // pred_check_branch
      %75 = sbr.rel (0) target = $region53
    $region52: #{tpu_custom_call.1} parent=1 // pred_region
      %76 = dma.done [#allocation6], 512
    $region53: #{tpu_custom_call.1} parent=1 // pred_fallthru
      _
    // Predicated region
    $region54: #{tpu_custom_call.1} parent=1 // pred_check
      _
    $region55: #{tpu_custom_call.1} parent=1 // pred_check_branch
      %78 = sbr.rel (0) target = $region57
    $region56: #{tpu_custom_call.1} parent=1 // pred_region
      %79 = dma.done [#allocation6], 512
    $region57: #{tpu_custom_call.1} parent=1 // pred_fallthru
      _
    %v81 = vld [vmem:[%s0] sm:$0xff]
    %v82 = vpack.c.bf16 %v81, %v81
    %v83 = vld [vmem:[#allocation2] sm:$0xf]
    %v84 = vld [vmem:[#allocation2 + $0x4] sm:$0xf]
    %v85 = vld [vmem:[%s2] sm:$0x1]
    %v87 = vlaneseq
    %v88 = vshrl.u32 %v87, 7
    %v89 = vsub.s32 0, %v88
    %v90 = vrot.slane %v85, %v89
    %v94 = vunpack.c.l.b16 %v83
    %v95 = vunpack.c.l.b16 %v84
    %v96 = vpack.c.b16 %v95, %v94
    %vm98 = vcmask 130048
    %v100 = vsel %vm98, %v82, 0
    %102 = vmatprep.subr.bf16.mxu0 0
    %103 = vmatpush1.bf16.msra.mxu0 %v96
    %104 = vmatprep.subr.bf16.mxu0 0
    %105 = vmatpush1.bf16.msra.mxu0 0
    %106 = vmatprep.subr.bf16.mxu0 0
    %107 = vmatpush1.bf16.msra.mxu0 0
    %108 = vmatprep.subr.bf16.mxu0 0
    %109 = vmatpush1.bf16.msra.mxu0 0
    %110 = vmatprep.subr.bf16.mxu0 0
    %111 = vmatpush1.bf16.msra.mxu0 0
    %112 = vmatprep.subr.bf16.mxu0 0
    %113 = vmatpush1.bf16.msra.mxu0 0
    %114 = vmatprep.subr.bf16.mxu0 0
    %115 = vmatpush1.bf16.msra.mxu0 0
    %116 = vmatprep.subr.bf16.mxu0 0
    %117 = vmatpush1.bf16.msra.mxu0 0
    %118 = vmatprep.subr.bf16.mxu0 0
    %119 = vmatpush1.bf16.msra.mxu0 0
    %120 = vmatprep.subr.bf16.mxu0 0
    %121 = vmatpush1.bf16.msra.mxu0 0
    %122 = vmatprep.subr.bf16.mxu0 0
    %123 = vmatpush1.bf16.msra.mxu0 0
    %124 = vmatprep.subr.bf16.mxu0 0
    %125 = vmatpush1.bf16.msra.mxu0 0
    %126 = vmatprep.subr.bf16.mxu0 0
    %127 = vmatpush1.bf16.msra.mxu0 0
    %128 = vmatprep.subr.bf16.mxu0 0
    %129 = vmatpush1.bf16.msra.mxu0 0
    %130 = vmatprep.subr.bf16.mxu0 0
    %131 = vmatpush1.bf16.msra.mxu0 0
    %132 = vmatprep.subr.bf16.mxu0 0
    %133 = vmatpush1.bf16.msra.mxu0 0
    %134 = vmatprep.mubr.bf16.mxu0 0
    %135 = vmatmul.mubr.bf16.gmra.mrb[0].mxu0 %v100
    %v136 = vpop.f32.mrb[0].mxu0
    %v137 = vadd.f32 %v90, %v136
    %v138 = vpop.f32.mrb[0].mxu0
    %v139 = vpop.f32.mrb[0].mxu0
    %v140 = vpop.f32.mrb[0].mxu0
    %141 = vdwg.mxu0
    %v142 = vtanh.pop %v137
    %v143 = vpack.c.bf16 %v142, %v142
    %v144 = vld [vmem:[%s3] sm:$0xf]
    %v145 = vld [vmem:[%s3 + $0x4] sm:$0xf]
    %v146 = vld [vmem:[%s3 + $0x8] sm:$0xf]
    %v147 = vld [vmem:[%s3 + $0xc] sm:$0xf]
    %v148 = vld [vmem:[%s3 + $0x10] sm:$0xf]
    %v149 = vld [vmem:[%s3 + $0x14] sm:$0xf]
    %v150 = vld [vmem:[%s3 + $0x18] sm:$0xf]
    %v151 = vld [vmem:[%s3 + $0x1c] sm:$0xf]
    %v152 = vld [vmem:[%s4] sm:$0x1]
    %v154 = vlaneseq
    %v155 = vshrl.u32 %v154, 7
    %v156 = vsub.s32 0, %v155
    %v157 = vrot.slane %v152, %v156
    %v167 = vunpack.c.l.b16 %v144
    %v168 = vunpack.c.l.b16 %v145
    %v169 = vunpack.c.l.b16 %v146
    %v170 = vunpack.c.l.b16 %v147
    %v171 = vunpack.c.l.b16 %v148
    %v172 = vunpack.c.l.b16 %v149
    %v173 = vunpack.c.l.b16 %v150
    %v174 = vunpack.c.l.b16 %v151
    %v175 = vpack.c.b16 %v168, %v167
    %v176 = vpack.c.b16 %v170, %v169
    %v177 = vpack.c.b16 %v172, %v171
    %v178 = vpack.c.b16 %v174, %v173
    %vm183 = vcmask 523264
    %v185 = vsel %vm183, %v143, 0
    %187 = vmatprep.subr.bf16.mxu0 0
    %188 = vmatpush1.bf16.msra.mxu0 %v175
    %189 = vmatprep.subr.bf16.mxu0 0
    %190 = vmatpush1.bf16.msra.mxu0 %v176
    %191 = vmatprep.subr.bf16.mxu0 0
    %192 = vmatpush1.bf16.msra.mxu0 %v177
    %193 = vmatprep.subr.bf16.mxu0 0
    %194 = vmatpush1.bf16.msra.mxu0 %v178
    %195 = vmatprep.subr.bf16.mxu0 0
    %196 = vmatpush1.bf16.msra.mxu0 0
    %197 = vmatprep.subr.bf16.mxu0 0
    %198 = vmatpush1.bf16.msra.mxu0 0
    %199 = vmatprep.subr.bf16.mxu0 0
    %200 = vmatpush1.bf16.msra.mxu0 0
    %201 = vmatprep.subr.bf16.mxu0 0
    %202 = vmatpush1.bf16.msra.mxu0 0
    %203 = vmatprep.subr.bf16.mxu0 0
    %204 = vmatpush1.bf16.msra.mxu0 0
    %205 = vmatprep.subr.bf16.mxu0 0
    %206 = vmatpush1.bf16.msra.mxu0 0
    %207 = vmatprep.subr.bf16.mxu0 0
    %208 = vmatpush1.bf16.msra.mxu0 0
    %209 = vmatprep.subr.bf16.mxu0 0
    %210 = vmatpush1.bf16.msra.mxu0 0
    %211 = vmatprep.subr.bf16.mxu0 0
    %212 = vmatpush1.bf16.msra.mxu0 0
    %213 = vmatprep.subr.bf16.mxu0 0
    %214 = vmatpush1.bf16.msra.mxu0 0
    %215 = vmatprep.subr.bf16.mxu0 0
    %216 = vmatpush1.bf16.msra.mxu0 0
    %217 = vmatprep.subr.bf16.mxu0 0
    %218 = vmatpush1.bf16.msra.mxu0 0
    %219 = vmatprep.mubr.bf16.mxu0 0
    %220 = vmatmul.mubr.bf16.gmra.mrb[0].mxu0 %v185
    %v221 = vpop.f32.mrb[0].mxu0
    %v222 = vadd.f32 %v157, %v221
    %v223 = vpop.f32.mrb[0].mxu0
    %v224 = vpop.f32.mrb[0].mxu0
    %v225 = vpop.f32.mrb[0].mxu0
    %226 = vdwg.mxu0
    %v227 = vtanh.pop %v222
    %v228 = vpack.c.bf16 %v227, %v227
    %v229 = vld [vmem:[#allocation5] sm:$0xf]
    %v230 = vld [vmem:[#allocation5 + $0x4] sm:$0xf]
    %v231 = vld [vmem:[#allocation5 + $0x8] sm:$0xf]
    %v232 = vld [vmem:[#allocation5 + $0xc] sm:$0xf]
    %v233 = vld [vmem:[#allocation5 + $0x10] sm:$0xf]
    %v234 = vld [vmem:[#allocation5 + $0x14] sm:$0xf]
    %v235 = vld [vmem:[#allocation5 + $0x18] sm:$0xf]
    %v236 = vld [vmem:[#allocation5 + $0x1c] sm:$0xf]
    %v237 = vld [vmem:[%s6] sm:$0x1]
    %v239 = vlaneseq
    %v240 = vshrl.u32 %v239, 7
    %v241 = vsub.s32 0, %v240
    %v242 = vrot.slane %v237, %v241
    %v252 = vunpack.c.l.b16 %v229
    %v253 = vunpack.c.l.b16 %v230
    %v254 = vunpack.c.l.b16 %v231
    %v255 = vunpack.c.l.b16 %v232
    %v256 = vunpack.c.l.b16 %v233
    %v257 = vunpack.c.l.b16 %v234
    %v258 = vunpack.c.l.b16 %v235
    %v259 = vunpack.c.l.b16 %v236
    %v260 = vpack.c.b16 %v253, %v252
    %v261 = vpack.c.b16 %v255, %v254
    %v262 = vpack.c.b16 %v257, %v256
    %v263 = vpack.c.b16 %v259, %v258
    %v269 = vsel %vm183, %v228, 0
    %271 = vmatprep.subr.bf16.mxu0 0
    %272 = vmatpush1.bf16.msra.mxu0 %v260
    %273 = vmatprep.subr.bf16.mxu0 0
    %274 = vmatpush1.bf16.msra.mxu0 %v261
    %275 = vmatprep.subr.bf16.mxu0 0
    %276 = vmatpush1.bf16.msra.mxu0 %v262
    %277 = vmatprep.subr.bf16.mxu0 0
    %278 = vmatpush1.bf16.msra.mxu0 %v263
    %279 = vmatprep.subr.bf16.mxu0 0
    %280 = vmatpush1.bf16.msra.mxu0 0
    %281 = vmatprep.subr.bf16.mxu0 0
    %282 = vmatpush1.bf16.msra.mxu0 0
    %283 = vmatprep.subr.bf16.mxu0 0
    %284 = vmatpush1.bf16.msra.mxu0 0
    %285 = vmatprep.subr.bf16.mxu0 0
    %286 = vmatpush1.bf16.msra.mxu0 0
    %287 = vmatprep.subr.bf16.mxu0 0
    %288 = vmatpush1.bf16.msra.mxu0 0
    %289 = vmatprep.subr.bf16.mxu0 0
    %290 = vmatpush1.bf16.msra.mxu0 0
    %291 = vmatprep.subr.bf16.mxu0 0
    %292 = vmatpush1.bf16.msra.mxu0 0
    %293 = vmatprep.subr.bf16.mxu0 0
    %294 = vmatpush1.bf16.msra.mxu0 0
    %295 = vmatprep.subr.bf16.mxu0 0
    %296 = vmatpush1.bf16.msra.mxu0 0
    %297 = vmatprep.subr.bf16.mxu0 0
    %298 = vmatpush1.bf16.msra.mxu0 0
    %299 = vmatprep.subr.bf16.mxu0 0
    %300 = vmatpush1.bf16.msra.mxu0 0
    %301 = vmatprep.subr.bf16.mxu0 0
    %302 = vmatpush1.bf16.msra.mxu0 0
    %303 = vmatprep.mubr.bf16.mxu0 0
    %304 = vmatmul.mubr.bf16.gmra.mrb[0].mxu0 %v269
    %v305 = vpop.f32.mrb[0].mxu0
    %v306 = vadd.f32 %v242, %v305
    %v307 = vpop.f32.mrb[0].mxu0
    %v308 = vpop.f32.mrb[0].mxu0
    %v309 = vpop.f32.mrb[0].mxu0
    %310 = vdwg.mxu0
    %v311 = vtanh.pop %v306
    %v312 = vpack.c.bf16 %v311, %v311
    %v313 = vld [vmem:[#allocation7] sm:$0xf]
    %v314 = vld [vmem:[#allocation7 + $0x4] sm:$0xf]
    %v315 = vld [vmem:[#allocation7 + $0x8] sm:$0xf]
    %v316 = vld [vmem:[#allocation7 + $0xc] sm:$0xf]
    %v317 = vld [vmem:[#allocation7 + $0x10] sm:$0xf]
    %v318 = vld [vmem:[#allocation7 + $0x14] sm:$0xf]
    %v319 = vld [vmem:[#allocation7 + $0x18] sm:$0xf]
    %v320 = vld [vmem:[#allocation7 + $0x1c] sm:$0xf]
    %v321 = vld [vmem:[%s8] sm:$0x1]
    %v323 = vlaneseq
    %v324 = vshrl.u32 %v323, 7
    %v325 = vsub.s32 0, %v324
    %v326 = vrot.slane %v321, %v325
    %v336 = vunpack.c.l.b16 %v313
    %v337 = vunpack.c.l.b16 %v314
    %v338 = vunpack.c.l.b16 %v315
    %v339 = vunpack.c.l.b16 %v316
    %v340 = vunpack.c.l.b16 %v317
    %v341 = vunpack.c.l.b16 %v318
    %v342 = vunpack.c.l.b16 %v319
    %v343 = vunpack.c.l.b16 %v320
    %v344 = vpack.c.b16 %v337, %v336
    %v345 = vpack.c.b16 %v339, %v338
    %v346 = vpack.c.b16 %v341, %v340
    %v347 = vpack.c.b16 %v343, %v342
    %v353 = vsel %vm183, %v312, 0
    %355 = vmatprep.subr.bf16.mxu0 0
    %356 = vmatpush1.bf16.msra.mxu0 %v344
    %357 = vmatprep.subr.bf16.mxu0 0
    %358 = vmatpush1.bf16.msra.mxu0 %v345
    %359 = vmatprep.subr.bf16.mxu0 0
    %360 = vmatpush1.bf16.msra.mxu0 %v346
    %361 = vmatprep.subr.bf16.mxu0 0
    %362 = vmatpush1.bf16.msra.mxu0 %v347
    %363 = vmatprep.subr.bf16.mxu0 0
    %364 = vmatpush1.bf16.msra.mxu0 0
    %365 = vmatprep.subr.bf16.mxu0 0
    %366 = vmatpush1.bf16.msra.mxu0 0
    %367 = vmatprep.subr.bf16.mxu0 0
    %368 = vmatpush1.bf16.msra.mxu0 0
    %369 = vmatprep.subr.bf16.mxu0 0
    %370 = vmatpush1.bf16.msra.mxu0 0
    %371 = vmatprep.subr.bf16.mxu0 0
    %372 = vmatpush1.bf16.msra.mxu0 0
    %373 = vmatprep.subr.bf16.mxu0 0
    %374 = vmatpush1.bf16.msra.mxu0 0
    %375 = vmatprep.subr.bf16.mxu0 0
    %376 = vmatpush1.bf16.msra.mxu0 0
    %377 = vmatprep.subr.bf16.mxu0 0
    %378 = vmatpush1.bf16.msra.mxu0 0
    %379 = vmatprep.subr.bf16.mxu0 0
    %380 = vmatpush1.bf16.msra.mxu0 0
    %381 = vmatprep.subr.bf16.mxu0 0
    %382 = vmatpush1.bf16.msra.mxu0 0
    %383 = vmatprep.subr.bf16.mxu0 0
    %384 = vmatpush1.bf16.msra.mxu0 0
    %385 = vmatprep.subr.bf16.mxu0 0
    %386 = vmatpush1.bf16.msra.mxu0 0
    %387 = vmatprep.mubr.bf16.mxu0 0
    %388 = vmatmul.mubr.bf16.gmra.mrb[0].mxu0 %v353
    %v389 = vpop.f32.mrb[0].mxu0
    %v390 = vadd.f32 %v326, %v389
    %v391 = vpop.f32.mrb[0].mxu0
    %v392 = vpop.f32.mrb[0].mxu0
    %v393 = vpop.f32.mrb[0].mxu0
    %394 = vdwg.mxu0
    %v395 = vtanh.pop %v390
    %v396 = vpack.c.bf16 %v395, %v395
    %v397 = vld [vmem:[%s9] sm:$0xf]
    %v398 = vld [vmem:[%s9 + $0x4] sm:$0xf]
    %v399 = vld [vmem:[%s9 + $0x8] sm:$0xf]
    %v400 = vld [vmem:[%s9 + $0xc] sm:$0xf]
    %v401 = vld [vmem:[%s9 + $0x10] sm:$0xf]
    %v402 = vld [vmem:[%s9 + $0x14] sm:$0xf]
    %v403 = vld [vmem:[%s9 + $0x18] sm:$0xf]
    %v404 = vld [vmem:[%s9 + $0x1c] sm:$0xf]
    %v405 = vld [vmem:[%s10] sm:$0x1]
    %v407 = vlaneseq
    %v408 = vshrl.u32 %v407, 7
    %v409 = vsub.s32 0, %v408
    %v410 = vrot.slane %v405, %v409
    %v420 = vunpack.c.l.b16 %v397
    %v421 = vunpack.c.l.b16 %v398
    %v422 = vunpack.c.l.b16 %v399
    %v423 = vunpack.c.l.b16 %v400
    %v424 = vunpack.c.l.b16 %v401
    %v425 = vunpack.c.l.b16 %v402
    %v426 = vunpack.c.l.b16 %v403
    %v427 = vunpack.c.l.b16 %v404
    %v428 = vpack.c.b16 %v421, %v420
    %v429 = vpack.c.b16 %v423, %v422
    %v430 = vpack.c.b16 %v425, %v424
    %v431 = vpack.c.b16 %v427, %v426
    %v437 = vsel %vm183, %v396, 0
    %439 = vmatprep.subr.bf16.mxu0 0
    %440 = vmatpush1.bf16.msra.mxu0 %v428
    %441 = vmatprep.subr.bf16.mxu0 0
    %442 = vmatpush1.bf16.msra.mxu0 %v429
    %443 = vmatprep.subr.bf16.mxu0 0
    %444 = vmatpush1.bf16.msra.mxu0 %v430
    %445 = vmatprep.subr.bf16.mxu0 0
    %446 = vmatpush1.bf16.msra.mxu0 %v431
    %447 = vmatprep.subr.bf16.mxu0 0
    %448 = vmatpush1.bf16.msra.mxu0 0
    %449 = vmatprep.subr.bf16.mxu0 0
    %450 = vmatpush1.bf16.msra.mxu0 0
    %451 = vmatprep.subr.bf16.mxu0 0
    %452 = vmatpush1.bf16.msra.mxu0 0
    %453 = vmatprep.subr.bf16.mxu0 0
    %454 = vmatpush1.bf16.msra.mxu0 0
    %455 = vmatprep.subr.bf16.mxu0 0
    %456 = vmatpush1.bf16.msra.mxu0 0
    %457 = vmatprep.subr.bf16.mxu0 0
    %458 = vmatpush1.bf16.msra.mxu0 0
    %459 = vmatprep.subr.bf16.mxu0 0
    %460 = vmatpush1.bf16.msra.mxu0 0
    %461 = vmatprep.subr.bf16.mxu0 0
    %462 = vmatpush1.bf16.msra.mxu0 0
    %463 = vmatprep.subr.bf16.mxu0 0
    %464 = vmatpush1.bf16.msra.mxu0 0
    %465 = vmatprep.subr.bf16.mxu0 0
    %466 = vmatpush1.bf16.msra.mxu0 0
    %467 = vmatprep.subr.bf16.mxu0 0
    %468 = vmatpush1.bf16.msra.mxu0 0
    %469 = vmatprep.subr.bf16.mxu0 0
    %470 = vmatpush1.bf16.msra.mxu0 0
    %471 = vmatprep.mubr.bf16.mxu0 0
    %472 = vmatmul.mubr.bf16.gmra.mrb[0].mxu0 %v437
    %v473 = vpop.f32.mrb[0].mxu0
    %v474 = vadd.f32 %v410, %v473
    %v475 = vpop.f32.mrb[0].mxu0
    %v476 = vpop.f32.mrb[0].mxu0
    %v477 = vpop.f32.mrb[0].mxu0
    %478 = vdwg.mxu0
    %v479 = vlaneseq
    %v480 = vand.u32 %v479, 127
    %vm481 = vcmp.ge.s32.totalorder %v480, 4
    %v482 = vmul.f32 %v474, 1.442695
    %v483 = vpow.pop %v482
    %v484 = vsel %vm481, %v483, %v474
    %vm485 = vcmask 64512
    %486 = vst.msk [vmem:[#allocation8] sm:$0xff] %vm485, %v484
    // Predicated region
    $region58: #{tpu_custom_call.1} parent=1 // pred_check
      _
    $region59: #{tpu_custom_call.1} parent=1 // pred_check_branch
      %488 = sbr.rel (0) target = $region61
    $region60: #{tpu_custom_call.1} parent=1 // pred_region
      %s490 = ssub.s32 128, 128
      %491 = vsyncadd [#allocation4], %s490
      %s493 = sshll.u32 [#allocation8], 4
      %s494 = int_to_ptr.vmem [resolvable:$true] %s493
      %496 = dma.vmem_to_hbm [thread:$0]  %s494, 128, %s11, [#allocation4]
    $region61: #{tpu_custom_call.1} parent=1 // pred_fallthru
      _
    // Predicated region
    $region62: #{tpu_custom_call.1} parent=1 // pred_check
      _
    $region63: #{tpu_custom_call.1} parent=1 // pred_check_branch
      %498 = sbr.rel (0) target = $region65
    $region64: #{tpu_custom_call.1} parent=1 // pred_region
      %499 = dma.done [#allocation4], 128
    $region65: #{tpu_custom_call.1} parent=1 // pred_fallthru
      _
    %500 = vsyncpa [#allocation3], 1
    %501 = vsyncpa [#allocation6], 1
    %502 = vsyncpa [#allocation4], 1

</llo_original>
